<compile_context>
chip_gen: v5e
topology: v5e:2x2
jax: 0.10.0
libtpu: 0.0.40
codegen_flags: <defaults>
</compile_context>

<pallas_src>
import math
import functools

import jax
import jax.numpy as jnp
from jax import lax
from jax.experimental import pallas as pl
from jax.experimental.pallas import tpu as pltpu


# ----------------------------------------------------------------------------
# Tiled linear layer:  y = x @ w + b
# ----------------------------------------------------------------------------
def _linear_kernel(x_ref, w_ref, b_ref, o_ref, acc_ref):
    k = pl.program_id(2)

    @pl.when(k == 0)
    def _init():
        acc_ref[...] = jnp.zeros_like(acc_ref)

    acc_ref[...] += jnp.dot(
        x_ref[...], w_ref[...], preferred_element_type=jnp.float32
    )

    @pl.when(k == pl.num_programs(2) - 1)
    def _finalize():
        o_ref[...] = (acc_ref[...] + b_ref[...].astype(jnp.float32)).astype(
            o_ref.dtype
        )


def linear(x, w, b, *, tm=256, tn=256, tk=512):
    """x: (M, K), w: (K, N), b: (N,) -> (M, N)."""
    M, K = x.shape
    K2, N = w.shape
    assert K == K2

    tm = min(tm, M)
    tn = min(tn, N)
    tk = min(tk, K)
    if M % tm:
        tm = M
    if N % tn:
        tn = N
    if K % tk:
        tk = K

    b2 = b.reshape(1, N)
    grid = (M // tm, N // tn, K // tk)

    return pl.pallas_call(
        _linear_kernel,
        out_shape=jax.ShapeDtypeStruct((M, N), x.dtype),
        grid_spec=pltpu.PrefetchScalarGridSpec(
            num_scalar_prefetch=0,
            grid=grid,
            in_specs=[
                pl.BlockSpec((tm, tk), lambda i, j, k: (i, k)),
                pl.BlockSpec((tk, tn), lambda i, j, k: (k, j)),
                pl.BlockSpec((1, tn), lambda i, j, k: (0, j)),
            ],
            out_specs=pl.BlockSpec((tm, tn), lambda i, j, k: (i, j)),
            scratch_shapes=[pltpu.VMEM((tm, tn), jnp.float32)],
        ),
        compiler_params=pltpu.CompilerParams(
            dimension_semantics=("parallel", "parallel", "arbitrary"),
        ),
    )(x, w, b2)


# ----------------------------------------------------------------------------
# Flash attention over all heads of one batch element per grid step.
# ----------------------------------------------------------------------------
def _flash_mha_kernel(
    q_ref, k_ref, v_ref, o_ref, m_sc, l_sc, acc_sc, *, causal, tq, tk, scale
):
    qi = pl.program_id(1)
    ki = pl.program_id(2)

    @pl.when(ki == 0)
    def _init():
        m_sc[...] = jnp.full_like(m_sc, -jnp.inf)
        l_sc[...] = jnp.zeros_like(l_sc)
        acc_sc[...] = jnp.zeros_like(acc_sc)

    q_start = qi * tq
    k_start = ki * tk

    def step(apply_mask):
        # Keep operands in their input dtype; f32 accumulation on the MXU.
        q = q_ref[0] * scale          # (H, TQ, D) — scale folded into q once
        k = k_ref[0]                  # (H, TK, D)
        v = v_ref[0]                  # (H, TK, D)

        # s[h, q, k] = sum_d q[h, q, d] * k[h, k, d]   (no explicit transpose)
        s = lax.dot_general(
            q,
            k,
            dimension_numbers=(((2,), (2,)), ((0,), (0,))),
            preferred_element_type=jnp.float32,
        )  # (H, TQ, TK)

        if apply_mask:
            row = q_start + lax.broadcasted_iota(jnp.int32, (tq, tk), 0)
            col = k_start + lax.broadcasted_iota(jnp.int32, (tq, tk), 1)
            s = jnp.where((col <= row)[None, :, :], s, -jnp.inf)

        m_prev = m_sc[...]
        m_new = jnp.maximum(m_prev, jnp.max(s, axis=-1, keepdims=True))
        alpha = jnp.exp(m_prev - m_new)
        p = jnp.exp(s - m_new)

        l_sc[...] = alpha * l_sc[...] + jnp.sum(p, axis=-1, keepdims=True)
        pv = lax.dot_general(
            p.astype(v.dtype),
            v,
            dimension_numbers=(((2,), (1,)), ((0,), (0,))),
            preferred_element_type=jnp.float32,
        )  # (H, TQ, D)
        acc_sc[...] = alpha * acc_sc[...] + pv
        m_sc[...] = m_new

    if causal:
        # Skip fully-masked kv tiles; build the iota mask only where the tile
        # crosses the diagonal.
        fully_masked = k_start > q_start + (tq - 1)
        crosses_diag = (k_start + (tk - 1)) > q_start

        @pl.when(jnp.logical_and(jnp.logical_not(fully_masked), crosses_diag))
        def _diag_tile():
            step(apply_mask=True)

        @pl.when(jnp.logical_not(crosses_diag))
        def _interior_tile():
            step(apply_mask=False)
    else:
        step(apply_mask=False)

    @pl.when(ki == pl.num_programs(2) - 1)
    def _finalize():
        # Normalize once, after PV.  (For causal attention every row has at
        # least the diagonal entry, so l > 0 and no NaN guard is needed.)
        inv_l = pl.reciprocal(l_sc[...], approx=True)
        o_ref[0] = (acc_sc[...] * inv_l).astype(o_ref.dtype)


def flash_attention(q, k, v, *, masked=False, tq=256, tk=256,
                    vmem_limit_bytes=None):
    """q, k, v: (B, H, S, D) -> (B, H, S, D).

    Tile defaults target the 256-wide MXU of v6e/v7x; use tq=tk=128 on v5e.
    On v7x (64 MiB VMEM) keep tiles such that double-buffered K/V + Q + the
    f32 accumulators stay well under ~24-28 MiB.
    """
    B, H, S, D = q.shape
    assert k.shape == v.shape == (B, H, S, D)

    tq = min(tq, S)
    tk = min(tk, S)
    if S % tq:
        tq = S
    if S % tk:
        tk = S

    scale = 1.0 / math.sqrt(D)
    kernel = functools.partial(
        _flash_mha_kernel, causal=masked, tq=tq, tk=tk, scale=scale
    )

    q_spec = pl.BlockSpec((1, H, tq, D), lambda b, qi, ki: (b, 0, qi, 0))
    kv_spec = pl.BlockSpec((1, H, tk, D), lambda b, qi, ki: (b, 0, ki, 0))

    return pl.pallas_call(
        kernel,
        out_shape=jax.ShapeDtypeStruct((B, H, S, D), q.dtype),
        grid_spec=pltpu.PrefetchScalarGridSpec(
            num_scalar_prefetch=0,
            grid=(B, S // tq, S // tk),
            in_specs=[q_spec, kv_spec, kv_spec],
            out_specs=q_spec,
            scratch_shapes=[
                pltpu.VMEM((H, tq, 1), jnp.float32),   # running max m
                pltpu.VMEM((H, tq, 1), jnp.float32),   # running sum l
                pltpu.VMEM((H, tq, D), jnp.float32),   # output accumulator
            ],
        ),
        compiler_params=pltpu.CompilerParams(
            dimension_semantics=("parallel", "parallel", "arbitrary"),
            vmem_limit_bytes=vmem_limit_bytes,
        ),
    )(q, k, v)


# ----------------------------------------------------------------------------
# MultiHeadAttention forward
# ----------------------------------------------------------------------------
def multi_head_attention(q, k, v, params, *, num_head, masked=False):
    B, S, E = q.shape
    H = num_head
    Dh = E // H

    def proj(x, w, b):
        y = linear(x.reshape(B * S, E), w, b)
        return y.reshape(B, S, H, Dh).transpose(0, 2, 1, 3)  # (B, H, S, Dh)

    qh = proj(q, params["wq"], params["bq"])
    kh = proj(k, params["wk"], params["bk"])
    vh = proj(v, params["wv"], params["bv"])

    attn = flash_attention(qh, kh, vh, masked=masked)  # (B, H, S, Dh)

    out = attn.transpose(0, 2, 1, 3).reshape(B * S, E)
    return linear(out, params["wo"], params["bo"]).reshape(B, S, E)


# ----------------------------------------------------------------------------
# Pure-JAX reference (matches the PyTorch module semantics, dropout=identity)
# ----------------------------------------------------------------------------
def _reference_mha(q, k, v, params, *, num_head, masked=False):
    B, S, E = q.shape
    H = num_head
    Dh = E // H

    def proj(x, w, b):
        return (x.reshape(B * S, E) @ w + b).reshape(B, S, H, Dh).transpose(
            0, 2, 1, 3
        )

    qh = proj(q, params["wq"], params["bq"])
    kh = proj(k, params["wk"], params["bk"])
    vh = proj(v, params["wv"], params["bv"])

    scores = jnp.einsum("bhqd,bhkd->bhqk", qh, kh) / math.sqrt(Dh)
    if masked:
        causal = jnp.tril(jnp.ones((S, S), dtype=bool))
        scores = jnp.where(causal, scores, -jnp.inf)
    p = jax.nn.softmax(scores, axis=-1)
    out = jnp.einsum("bhqk,bhkd->bhqd", p, vh)
    out = out.transpose(0, 2, 1, 3).reshape(B * S, E)
    return (out @ params["wo"] + params["bo"]).reshape(B, S, E)


if __name__ == "__main__":
    key = jax.random.PRNGKey(0)
    keys = jax.random.split(key, 11)

    B, S, E, H = 2, 8, 32, 4  # batch, seq, d_model, num_head (head_dim = 8)

    q = jax.random.normal(keys[0], (B, S, E), dtype=jnp.float32)
    k = jax.random.normal(keys[1], (B, S, E), dtype=jnp.float32)
    v = jax.random.normal(keys[2], (B, S, E), dtype=jnp.float32)

    w_scale = 1.0 / math.sqrt(E)
    params = {
        "wq": jax.random.normal(keys[3], (E, E), jnp.float32) * w_scale,
        "bq": jax.random.normal(keys[4], (E,), jnp.float32) * 0.1,
        "wk": jax.random.normal(keys[5], (E, E), jnp.float32) * w_scale,
        "bk": jax.random.normal(keys[6], (E,), jnp.float32) * 0.1,
        "wv": jax.random.normal(keys[7], (E, E), jnp.float32) * w_scale,
        "bv": jax.random.normal(keys[8], (E,), jnp.float32) * 0.1,
        "wo": jax.random.normal(keys[9], (E, E), jnp.float32) * w_scale,
        "bo": jax.random.normal(keys[10], (E,), jnp.float32) * 0.1,
    }

    # Unmasked attention
    out = multi_head_attention(q, k, v, params, num_head=H, masked=False)
    out = jax.block_until_ready(out)
    ref = _reference_mha(q, k, v, params, num_head=H, masked=False)
    assert jnp.allclose(out, ref, atol=5e-3, rtol=5e-3), "unmasked mismatch"

    # Causal (masked) attention
    out_m = multi_head_attention(q, k, v, params, num_head=H, masked=True)
    out_m = jax.block_until_ready(out_m)
    ref_m = _reference_mha(q, k, v, params, num_head=H, masked=True)
    assert jnp.allclose(out_m, ref_m, atol=5e-3, rtol=5e-3), "masked mismatch"

    print("KERNEL_OK")
</pallas_src>

<mosaic_0001>
module attributes {stable_mosaic.version = 11 : i64} {
  func.func @_linear_kernel(%arg0: i32, %arg1: i32, %arg2: i32, %arg3: memref<16x32xf32, #tpu.memory_space<vmem>>, %arg4: memref<32x32xf32, #tpu.memory_space<vmem>>, %arg5: memref<1x32xf32, #tpu.memory_space<vmem>>, %arg6: memref<16x32xf32, #tpu.memory_space<vmem>>, %arg7: memref<16x32xf32, #tpu.memory_space<vmem>>) attributes {dimension_semantics = [#tpu.dimension_semantics<parallel>, #tpu.dimension_semantics<parallel>, #tpu.dimension_semantics<arbitrary>], iteration_bounds = array<i64: 1, 1, 1>, scalar_prefetch = 0 : i64, scratch_operands = 1 : i64, tpu.core_type = #tpu.core_type<tc>, window_params = [{transform_indices = @transform_0, window_bounds = array<i64: 16, 32>}, {transform_indices = @transform_1, window_bounds = array<i64: 32, 32>}, {transform_indices = @transform_2, window_bounds = array<i64: 1, 32>}, {transform_indices = @transform_3, window_bounds = array<i64: 16, 32>}]} {
    %c0_i32 = arith.constant 0 : i32
    %0 = arith.cmpi eq, %arg2, %c0_i32 : i32
    %1 = arith.extui %0 : i1 to i32
    %c0_i32_0 = arith.constant 0 : i32
    %2 = arith.cmpi ne, %1, %c0_i32_0 : i32
    scf.if %2 {
      %cst_10 = arith.constant 0.000000e+00 : f32
      %12 = vector.broadcast %cst_10 : f32 to vector<16x32xf32>
      %c0_11 = arith.constant 0 : index
      %c0_12 = arith.constant 0 : index
      %13 = vector.load %arg7[%c0_11, %c0_12] : memref<16x32xf32, #tpu.memory_space<vmem>>, vector<16x32xf32>
      tpu.vector_store %arg7[%c0_11, %c0_12], %12 {strides = array<i32>} : memref<16x32xf32, #tpu.memory_space<vmem>>, vector<16x32xf32>,
    } else {
    }
    %c0 = arith.constant 0 : index
    %c0_1 = arith.constant 0 : index
    %3 = vector.load %arg7[%c0, %c0_1] : memref<16x32xf32, #tpu.memory_space<vmem>>, vector<16x32xf32>
    %c0_2 = arith.constant 0 : index
    %c0_3 = arith.constant 0 : index
    %4 = vector.load %arg3[%c0_2, %c0_3] : memref<16x32xf32, #tpu.memory_space<vmem>>, vector<16x32xf32>
    %c0_4 = arith.constant 0 : index
    %c0_5 = arith.constant 0 : index
    %5 = vector.load %arg4[%c0_4, %c0_5] : memref<32x32xf32, #tpu.memory_space<vmem>>, vector<32x32xf32>
    %cst = arith.constant dense<0.000000e+00> : vector<16x32xf32>
    %6 = tpu.matmul %4, %5, %cst {dimension_numbers = #tpu.dot_dimension_numbers<[1], [0], [0], [1], [0, 0, 1, 1], [], []>} : vector<16x32xf32>, vector<32x32xf32>, vector<16x32xf32> -> vector<16x32xf32>
    %7 = arith.addf %3, %6 : vector<16x32xf32>
    %c0_6 = arith.constant 0 : index
    %c0_7 = arith.constant 0 : index
    %8 = vector.load %arg7[%c0_6, %c0_7] : memref<16x32xf32, #tpu.memory_space<vmem>>, vector<16x32xf32>
    tpu.vector_store %arg7[%c0_6, %c0_7], %7 {strides = array<i32>} : memref<16x32xf32, #tpu.memory_space<vmem>>, vector<16x32xf32>,
    %c0_i32_8 = arith.constant 0 : i32
    %9 = arith.cmpi eq, %arg2, %c0_i32_8 : i32
    %10 = arith.extui %9 : i1 to i32
    %c0_i32_9 = arith.constant 0 : i32
    %11 = arith.cmpi ne, %10, %c0_i32_9 : i32
    scf.if %11 {
      %c0_10 = arith.constant 0 : index
      %c0_11 = arith.constant 0 : index
      %12 = vector.load %arg7[%c0_10, %c0_11] : memref<16x32xf32, #tpu.memory_space<vmem>>, vector<16x32xf32>
      %c0_12 = arith.constant 0 : index
      %c0_13 = arith.constant 0 : index
      %13 = vector.load %arg5[%c0_12, %c0_13] : memref<1x32xf32, #tpu.memory_space<vmem>>, vector<1x32xf32>
      %14 = vector.broadcast %13 : vector<1x32xf32> to vector<16x32xf32>
      %15 = arith.addf %12, %14 : vector<16x32xf32>
      %c0_14 = arith.constant 0 : index
      %c0_15 = arith.constant 0 : index
      %16 = vector.load %arg6[%c0_14, %c0_15] : memref<16x32xf32, #tpu.memory_space<vmem>>, vector<16x32xf32>
      tpu.vector_store %arg6[%c0_14, %c0_15], %15 {strides = array<i32>} : memref<16x32xf32, #tpu.memory_space<vmem>>, vector<16x32xf32>,
    } else {
    }
    return
  }
  func.func @transform_0(%arg0: i32, %arg1: i32, %arg2: i32) -> (i32, i32) {
    %c0_i32 = arith.constant 0 : i32
    return %arg0, %arg2 : i32, i32
  }
  func.func @transform_1(%arg0: i32, %arg1: i32, %arg2: i32) -> (i32, i32) {
    %c0_i32 = arith.constant 0 : i32
    return %arg2, %arg1 : i32, i32
  }
  func.func @transform_2(%arg0: i32, %arg1: i32, %arg2: i32) -> (i32, i32) {
    %c0_i32 = arith.constant 0 : i32
    %c0_i32_0 = arith.constant 0 : i32
    return %c0_i32, %arg1 : i32, i32
  }
  func.func @transform_3(%arg0: i32, %arg1: i32, %arg2: i32) -> (i32, i32) {
    %c0_i32 = arith.constant 0 : i32
    return %arg0, %arg1 : i32, i32
  }
}

</mosaic_0001>

<llo_original>
// kernel: tpu_custom_call.1
$region0: #{tpu_custom_call.1}
  #allocation0 [shape = 'u32[]', space=smem, size = 0x4, offset = 0x4, fixed_abs, tag = 'smem constant byte address 0x4 - core index']
  #allocation1 [shape = 'u32[72,128]{1,0:T(1,128)}', space=vmem, size = 0x9000, scoped, tag = 'internal scratch']
  #allocation2 [shape = 'f32[16,32]{1,0:T(8,128)}', space=vmem, size = 0x2000, scoped, tag = 'scratch operand']
  %s0 = inlined_call_operand.hbm [shape: f32[16,32], index: 0, kind: input, shape index: {}]
  %s1 = inlined_call_operand.hbm [shape: f32[32,32], index: 1, kind: input, shape index: {}]
  %s2 = inlined_call_operand.vmem [shape: f32[1,32], index: 2, kind: input, shape index: {}]
  %s3 = inlined_call_operand.hbm [shape: f32[16,32], index: 3, kind: output, shape index: {}]
  %s4 = sld [smem:[#allocation0]]
  $region38: #{tpu_custom_call.1} parent=0
    _
  %s6 = ssub.s32 1, %s4
  %s7 = scalar_select 0, %s6, %s4
  $region1: #{tpu_custom_call.1} parent=0
    #allocation3 [shape = 'u8[8192]{0}', space=vmem, size = 0x2000, scoped, tag = 'input window, operand 0, single buffered']
    #allocation4 [shape = 's32[1]{0}', space=sflag, size = 0x4, scoped, tag = 'scoped memory for tpu_custom_call.1']
    #allocation5 [shape = 's32[1]{0}', space=sflag, size = 0x4, scoped, tag = 'scoped memory for tpu_custom_call.1']
    #allocation6 [shape = 'u8[16384]{0}', space=vmem, size = 0x4000, scoped, tag = 'input window, operand 1, single buffered']
    #allocation7 [shape = 's32[1]{0}', space=sflag, size = 0x4, scoped, tag = 'scoped memory for tpu_custom_call.1']
    #allocation8 [shape = 'u8[8192]{0}', space=vmem, size = 0x2000, scoped, tag = 'output window, operand 0, single buffered']
    %8 = vsyncpa [#allocation4], 0
    %9 = vsyncpa [#allocation7], 0
    %10 = vsyncpa [#allocation5], 0
    // Predicated region
    $region2: #{tpu_custom_call.1} parent=1 // pred_check
      _
    $region3: #{tpu_custom_call.1} parent=1 // pred_check_branch
      %12 = sbr.rel (0) target = $region5
    $region4: #{tpu_custom_call.1} parent=1 // pred_region
      %14 = vsyncadd [#allocation4], 0
      %s15 = sshll.u32 %s0, 4
      %s16 = int_to_ptr.hbm [resolvable:$true] %s15
      %s17 = sshll.u32 [#allocation3], 4
      %s18 = int_to_ptr.vmem [resolvable:$true] %s17
      %23 = dma.hbm_to_vmem [thread:$0]  %s16, 256, %s18, [#allocation4], 128, 128, 8
    $region5: #{tpu_custom_call.1} parent=1 // pred_fallthru
      _
    // Predicated region
    $region6: #{tpu_custom_call.1} parent=1 // pred_check
      _
    $region7: #{tpu_custom_call.1} parent=1 // pred_check_branch
      %25 = sbr.rel (0) target = $region9
    $region8: #{tpu_custom_call.1} parent=1 // pred_region
      %27 = vsyncadd [#allocation7], 0
      %s28 = sshll.u32 %s1, 4
      %s29 = int_to_ptr.hbm [resolvable:$true] %s28
      %s30 = sshll.u32 [#allocation6], 4
      %s31 = int_to_ptr.vmem [resolvable:$true] %s30
      %36 = dma.hbm_to_vmem [thread:$0]  %s29, 512, %s31, [#allocation7], 128, 128, 8
    $region9: #{tpu_custom_call.1} parent=1 // pred_fallthru
      _
    // Predicated region
    $region10: #{tpu_custom_call.1} parent=1 // pred_check
      _
    $region11: #{tpu_custom_call.1} parent=1 // pred_check_branch
      %38 = sbr.rel (0) target = $region13
    $region12: #{tpu_custom_call.1} parent=1 // pred_region
      _
    $region13: #{tpu_custom_call.1} parent=1 // pred_fallthru
      _
    // Predicated region
    $region14: #{tpu_custom_call.1} parent=1 // pred_check
      _
    $region15: #{tpu_custom_call.1} parent=1 // pred_check_branch
      %40 = sbr.rel (0) target = $region17
    $region16: #{tpu_custom_call.1} parent=1 // pred_region
      %42 = dma.done [#allocation4], 256
    $region17: #{tpu_custom_call.1} parent=1 // pred_fallthru
      _
    // Predicated region
    $region18: #{tpu_custom_call.1} parent=1 // pred_check
      _
    $region19: #{tpu_custom_call.1} parent=1 // pred_check_branch
      %44 = sbr.rel (0) target = $region21
    $region20: #{tpu_custom_call.1} parent=1 // pred_region
      %46 = dma.done [#allocation7], 512
    $region21: #{tpu_custom_call.1} parent=1 // pred_fallthru
      _
    %p47 = scmp.eq.s32.totalorder 0, 0
    // Predicated region
    $region22: #{tpu_custom_call.1} parent=1 // pred_check
      %p48 = pneg %p47
    $region23: #{tpu_custom_call.1} parent=1 // pred_check_branch
      %50 = sbr.rel (%p48) target = $region25
    $region24: #{tpu_custom_call.1} parent=1 // pred_region
      %vm51 = vcmask 261120
      %52 = vst.msk [vmem:[#allocation2] sm:$0xff] %vm51, 0.0
      %53 = vst.msk [vmem:[#allocation2 + $0x8] sm:$0xff] %vm51, 0.0
    $region25: #{tpu_custom_call.1} parent=1 // pred_fallthru
      _
    %v54 = vld [vmem:[#allocation2] sm:$0xff]
    %v55 = vld [vmem:[#allocation2 + $0x8] sm:$0xff]
    %v56 = vld [vmem:[#allocation3] sm:$0xff]
    %v57 = vld [vmem:[#allocation3 + $0x8] sm:$0xff]
    %v58 = vld [vmem:[#allocation6] sm:$0xff]
    %v59 = vld [vmem:[#allocation6 + $0x8] sm:$0xff]
    %v60 = vld [vmem:[#allocation6 + $0x10] sm:$0xff]
    %v61 = vld [vmem:[#allocation6 + $0x18] sm:$0xff]
    %vm62 = vcmask 261120
    %v64 = vsel %vm62, %v56, 0
    %v67 = vsel %vm62, %v57, 0
    %69 = vmatpush.msra.mxu0 0.0
    %70 = vmatpush.msra.mxu0 0.0
    %71 = vmatpush.msra.mxu0 0.0
    %72 = vmatpush.msra.mxu0 0.0
    %73 = vmatpush.msra.mxu0 0.0
    %74 = vmatpush.msra.mxu0 0.0
    %75 = vmatpush.msra.mxu0 0.0
    %76 = vmatpush.msra.mxu0 0.0
    %77 = vmatpush.msra.mxu0 0.0
    %78 = vmatpush.msra.mxu0 0.0
    %79 = vmatpush.msra.mxu0 0.0
    %80 = vmatpush.msra.mxu0 0.0
    %81 = vmatpush.msra.mxu0 %v61
    %82 = vmatpush.msra.mxu0 %v60
    %83 = vmatpush.msra.mxu0 %v59
    %84 = vmatpush.msra.mxu0 %v58
    %85 = vmatmul.f32.gmra.mxu0 %v64
    %v86 = vpop.f32.mrf.mxu0
    %v87 = vadd.f32 0.0, %v86
    %88 = vmatmul.f32.gmra.mxu0 %v67
    %v89 = vpop.f32.mrf.mxu0
    %v90 = vadd.f32 0.0, %v89
    %91 = vdwg.mxu0
    %v92 = vadd.f32 %v54, %v87
    %v93 = vadd.f32 %v55, %v90
    %94 = vst.msk [vmem:[#allocation2] sm:$0xff] %vm62, %v92
    %95 = vst.msk [vmem:[#allocation2 + $0x8] sm:$0xff] %vm62, %v93
    // Predicated region
    $region26: #{tpu_custom_call.1} parent=1 // pred_check
      %p96 = pneg %p47
    $region27: #{tpu_custom_call.1} parent=1 // pred_check_branch
      %98 = sbr.rel (%p96) target = $region29
    $region28: #{tpu_custom_call.1} parent=1 // pred_region
      %v99 = vld [vmem:[#allocation2] sm:$0xff]
      %v100 = vld [vmem:[#allocation2 + $0x8] sm:$0xff]
      %v101 = vld [vmem:[%s2] sm:$0x1]
      %v103 = vperm.slane %v101, 0
      %v105 = vadd.f32 %v99, %v103
      %v106 = vadd.f32 %v100, %v103
      %107 = vst.msk [vmem:[#allocation8] sm:$0xff] %vm62, %v105
      %108 = vst.msk [vmem:[#allocation8 + $0x8] sm:$0xff] %vm62, %v106
    $region29: #{tpu_custom_call.1} parent=1 // pred_fallthru
      _
    // Predicated region
    $region30: #{tpu_custom_call.1} parent=1 // pred_check
      _
    $region31: #{tpu_custom_call.1} parent=1 // pred_check_branch
      %110 = sbr.rel (0) target = $region33
    $region32: #{tpu_custom_call.1} parent=1 // pred_region
      %112 = vsyncadd [#allocation5], 0
      %s113 = sshll.u32 [#allocation8], 4
      %s114 = int_to_ptr.vmem [resolvable:$true] %s113
      %s115 = sshll.u32 %s3, 4
      %s116 = int_to_ptr.hbm [resolvable:$true] %s115
      %121 = dma.vmem_to_hbm [thread:$0]  %s114, 256, %s116, [#allocation5], 128, 128, 8
    $region33: #{tpu_custom_call.1} parent=1 // pred_fallthru
      _
    // Predicated region
    $region34: #{tpu_custom_call.1} parent=1 // pred_check
      _
    $region35: #{tpu_custom_call.1} parent=1 // pred_check_branch
      %123 = sbr.rel (0) target = $region37
    $region36: #{tpu_custom_call.1} parent=1 // pred_region
      %125 = dma.done [#allocation5], 256
    $region37: #{tpu_custom_call.1} parent=1 // pred_fallthru
      _
    %126 = vsyncpa [#allocation4], 1
    %127 = vsyncpa [#allocation7], 1
    %128 = vsyncpa [#allocation5], 1

</llo_original>
